<compile_context>
chip_gen: v6e
topology: v6e:2x2x1
jax: 0.10.0
libtpu: 0.0.40
codegen_flags: <defaults>
</compile_context>

<pallas_src>
import numpy as np
import jax
import jax.numpy as jnp
from jax.experimental import pallas as pl
from jax.experimental.pallas import tpu as pltpu

# ---------------------------------------------------------------------------
# Fixed constants from the reference module (mano.*).
# ---------------------------------------------------------------------------
ANCESTOR_INDEX = [[], [0], [0, 1], [0, 1, 2], [0], [0, 4], [0, 4, 5], [0],
                  [0, 7], [0, 7, 8], [0], [0, 10], [0, 10, 11], [0],
                  [0, 13], [0, 13, 14]]
SHAPE_PARAM_DIM = 10                         # mano.shape_param_dim
ORIG_JOINT_NUM = len(ANCESTOR_INDEX)         # mano.orig_joint_num == 16
POSE6D_DIM = 6 * ORIG_JOINT_NUM              # 96
SHAPE_OUT_DIM = 3 * SHAPE_PARAM_DIM          # 30
CAM_OUT_DIM = 9
HEADS_DIM = SHAPE_OUT_DIM + CAM_OUT_DIM      # 39
LANE = 128                                   # padded lane width for lane-dense stores

# Small synthetic sizes (these are configurable knobs of the real module).
BATCH = 2
IN_CHANS = 64          # in_chans       (2048 in the real model)
IN_CHANS_POSE = 32     # in_chans_pose  (512  in the real model)
NUM_JOINTS = 4         # opt_params['num_joints'] (21 in the real model)
H = W = 8
FEAT_ONE_DIM = NUM_JOINTS * (IN_CHANS_POSE + 3)


# ---------------------------------------------------------------------------
# Single fused kernel: global average pool + fused shape/cam heads + folded
# joint-regressor chain (one matmul each, all outputs 128-lane dense).
# ---------------------------------------------------------------------------
def _regressor_kernel(x_ref, wh_ref, bh_ref, feat_ref, weff_ref, beff_ref,
                      heads_ref, pose_ref):
    # x_ref: (B, H*W, C) channel-last -> pool over spatial axis (sublane reduce).
    pooled = jnp.mean(x_ref[...], axis=1)                       # (B, C)
    # Fused shape_out | cam_out heads, padded to 128 output lanes.
    heads_ref[...] = (jnp.dot(pooled, wh_ref[...],
                              preferred_element_type=jnp.float32) + bh_ref[...])
    # Folded joint chain: pose = feat_one @ W_eff + b_eff  (W_eff = w_base @ (I+A+A^2+A^3)).
    pose_ref[...] = (jnp.dot(feat_ref[...], weff_ref[...],
                             preferred_element_type=jnp.float32) + beff_ref[...])


def regressor_fused(x_pool, w_heads, b_heads, feat_all, w_eff, b_eff):
    B = x_pool.shape[0]
    N = feat_all.shape[0]
    heads, pose = pl.pallas_call(
        _regressor_kernel,
        grid=(1,),
        in_specs=[
            pl.BlockSpec(x_pool.shape, lambda i: (0, 0, 0)),
            pl.BlockSpec(w_heads.shape, lambda i: (0, 0)),
            pl.BlockSpec(b_heads.shape, lambda i: (0, 0)),
            pl.BlockSpec(feat_all.shape, lambda i: (0, 0)),
            pl.BlockSpec(w_eff.shape, lambda i: (0, 0)),
            pl.BlockSpec(b_eff.shape, lambda i: (0, 0)),
        ],
        out_specs=(
            pl.BlockSpec((B, LANE), lambda i: (0, 0)),
            pl.BlockSpec((N, LANE), lambda i: (0, 0)),
        ),
        out_shape=(
            jax.ShapeDtypeStruct((B, LANE), jnp.float32),
            jax.ShapeDtypeStruct((N, LANE), jnp.float32),
        ),
        compiler_params=pltpu.CompilerParams(dimension_semantics=("arbitrary",)),
    )(x_pool, w_heads, b_heads, feat_all, w_eff, b_eff)
    return heads, pose


# ---------------------------------------------------------------------------
# rot6d -> axis-angle (Gram-Schmidt -> rotmat -> quaternion -> axis-angle),
# replicating F.normalize / tgm.rotation_matrix_to_angle_axis semantics.
# TODO(synk): tiny atan2-heavy elementwise tail kept in plain JAX glue
# (negligible compute; the matmul hot paths live in the Pallas kernel above).
# ---------------------------------------------------------------------------
def rot6d_to_axis_angle(x):
    n = x.shape[0]
    x = x.reshape(n, 3, 2)
    a1, a2 = x[:, :, 0], x[:, :, 1]
    b1 = a1 / jnp.maximum(jnp.linalg.norm(a1, axis=1, keepdims=True), 1e-12)
    proj = jnp.sum(b1 * a2, axis=1, keepdims=True)
    u2 = a2 - proj * b1
    b2 = u2 / jnp.maximum(jnp.linalg.norm(u2, axis=1, keepdims=True), 1e-12)
    b3 = jnp.cross(b1, b2)
    # tgm works on the transposed matrix, whose rows are b1, b2, b3.
    r00, r01, r02 = b1[:, 0], b1[:, 1], b1[:, 2]
    r10, r11, r12 = b2[:, 0], b2[:, 1], b2[:, 2]
    r20, r21, r22 = b3[:, 0], b3[:, 1], b3[:, 2]

    eps = 1e-6
    t0 = 1.0 + r00 - r11 - r22
    q0 = jnp.stack([r12 - r21, t0, r01 + r10, r20 + r02], axis=-1)
    t1 = 1.0 - r00 + r11 - r22
    q1 = jnp.stack([r20 - r02, r01 + r10, t1, r12 + r21], axis=-1)
    t2 = 1.0 - r00 - r11 + r22
    q2 = jnp.stack([r01 - r10, r20 + r02, r12 + r21, t2], axis=-1)
    t3 = 1.0 + r00 + r11 + r22
    q3 = jnp.stack([t3, r12 - r21, r20 - r02, r01 - r10], axis=-1)

    mask_d2 = r22 < eps
    mask_d0_d1 = r00 > r11
    mask_d0_nd1 = r00 < -r11
    c0 = (mask_d2 & mask_d0_d1)[:, None].astype(x.dtype)
    c1 = (mask_d2 & ~mask_d0_d1)[:, None].astype(x.dtype)
    c2 = (~mask_d2 & mask_d0_nd1)[:, None].astype(x.dtype)
    c3 = (~mask_d2 & ~mask_d0_nd1)[:, None].astype(x.dtype)
    q = q0 * c0 + q1 * c1 + q2 * c2 + q3 * c3
    q = q / jnp.sqrt(t0[:, None] * c0 + t1[:, None] * c1 +
                     t2[:, None] * c2 + t3[:, None] * c3)
    q = q * 0.5

    qw, qx, qy, qz = q[:, 0], q[:, 1], q[:, 2], q[:, 3]
    sin_sq = qx * qx + qy * qy + qz * qz
    sin_theta = jnp.sqrt(sin_sq)
    two_theta = 2.0 * jnp.where(qw < 0.0,
                                jnp.arctan2(-sin_theta, -qw),
                                jnp.arctan2(sin_theta, qw))
    k = jnp.where(sin_sq > 0.0, two_theta / sin_theta, 2.0 * jnp.ones_like(sin_theta))
    aa = jnp.stack([qx * k, qy * k, qz * k], axis=-1)
    return jnp.where(jnp.isnan(aa), 0.0, aa)


# ---------------------------------------------------------------------------
# Deterministic parameter construction (shapes match Regressor.__init__),
# plus host-side packing / algebraic folding for the fused kernel.
# ---------------------------------------------------------------------------
def init_params(key):
    keys = jax.random.split(key, 6 + 2 * ORIG_JOINT_NUM)
    p = {}
    p["w_shape"] = 0.02 * jax.random.normal(keys[0], (IN_CHANS, SHAPE_OUT_DIM), jnp.float32)
    p["b_shape"] = 0.02 * jax.random.normal(keys[1], (1, SHAPE_OUT_DIM), jnp.float32)
    p["w_cam"] = 0.02 * jax.random.normal(keys[2], (IN_CHANS, CAM_OUT_DIM), jnp.float32)
    p["b_cam"] = 0.02 * jax.random.normal(keys[3], (1, CAM_OUT_DIM), jnp.float32)

    reg_ws, reg_bs = [], []
    for k, anc in enumerate(ANCESTOR_INDEX):
        in_dim = FEAT_ONE_DIM + 6 * len(anc)
        reg_ws.append(0.05 * jax.random.normal(keys[4 + 2 * k], (in_dim, 6), jnp.float32))
        reg_bs.append(0.05 * jax.random.normal(keys[5 + 2 * k], (6,), jnp.float32))
    p["reg_ws"], p["reg_bs"] = reg_ws, reg_bs

    # ---- Fused shape|cam head, padded to 128 lanes -------------------------
    w_heads = np.zeros((IN_CHANS, LANE), np.float32)
    b_heads = np.zeros((1, LANE), np.float32)
    w_heads[:, :SHAPE_OUT_DIM] = np.asarray(p["w_shape"])
    w_heads[:, SHAPE_OUT_DIM:HEADS_DIM] = np.asarray(p["w_cam"])
    b_heads[0, :SHAPE_OUT_DIM] = np.asarray(p["b_shape"])[0]
    b_heads[0, SHAPE_OUT_DIM:HEADS_DIM] = np.asarray(p["b_cam"])[0]
    p["w_heads"] = jnp.asarray(w_heads)
    p["b_heads"] = jnp.asarray(b_heads)

    # ---- Pack the 16 per-joint regressors and fold the ancestor chain ------
    w_base = np.zeros((FEAT_ONE_DIM, POSE6D_DIM), np.float64)
    b_all = np.zeros((1, POSE6D_DIM), np.float64)
    anc_w = np.zeros((POSE6D_DIM, POSE6D_DIM), np.float64)  # A: block (i, k)
    for k, anc in enumerate(ANCESTOR_INDEX):
        wk = np.asarray(reg_ws[k], np.float64)
        w_base[:, 6 * k:6 * k + 6] = wk[:FEAT_ONE_DIM, :]
        b_all[0, 6 * k:6 * k + 6] = np.asarray(reg_bs[k], np.float64)
        for j, i in enumerate(anc):
            anc_w[6 * i:6 * i + 6, 6 * k:6 * k + 6] = \
                wk[FEAT_ONE_DIM + 6 * j:FEAT_ONE_DIM + 6 * (j + 1), :]

    # A is strictly block-upper-triangular with max chain depth 3 => A^4 == 0,
    # so the sequential recursion pose = base + pose @ A collapses to
    # pose = base @ (I + A + A^2 + A^3).
    eye = np.eye(POSE6D_DIM, dtype=np.float64)
    a2 = anc_w @ anc_w
    m_fold = eye + anc_w + a2 + a2 @ anc_w
    w_eff = np.zeros((FEAT_ONE_DIM, LANE), np.float32)
    b_eff = np.zeros((1, LANE), np.float32)
    w_eff[:, :POSE6D_DIM] = (w_base @ m_fold).astype(np.float32)
    b_eff[:, :POSE6D_DIM] = (b_all @ m_fold).astype(np.float32)
    p["w_eff"] = jnp.asarray(w_eff)
    p["b_eff"] = jnp.asarray(b_eff)
    return p


# ---------------------------------------------------------------------------
# Forward pass (mirrors Regressor.forward).
# ---------------------------------------------------------------------------
def regressor_forward(params, feat_blur, feat_joint_e1, feat_joint_md, feat_joint_e2,
                      joint_img_e1, joint_img_md, joint_img_e2):
    B, C, Hh, Ww = feat_blur.shape
    # Channel-last layout: channels on lanes (lane-dense for the real-model C=2048).
    x_pool = jnp.transpose(feat_blur.reshape(B, C, Hh * Ww), (0, 2, 1))

    feat_one_e1 = jnp.concatenate([feat_joint_e1, joint_img_e1], axis=2).reshape(B, -1)
    feat_one_md = jnp.concatenate([feat_joint_md, joint_img_md], axis=2).reshape(B, -1)
    feat_one_e2 = jnp.concatenate([feat_joint_e2, joint_img_e2], axis=2).reshape(B, -1)
    # The three streams share the joint regressors -> single matmul over 3B rows.
    feat_all = jnp.concatenate([feat_one_e1, feat_one_md, feat_one_e2], axis=0)

    heads, pose_all = regressor_fused(x_pool, params["w_heads"], params["b_heads"],
                                      feat_all, params["w_eff"], params["b_eff"])
    shape_param = heads[:, :SHAPE_OUT_DIM]
    cam_param = heads[:, SHAPE_OUT_DIM:HEADS_DIM]
    pose_all = pose_all[:, :POSE6D_DIM]

    mano_shape_e1, mano_shape_md, mano_shape_e2 = jnp.split(shape_param, 3, axis=1)
    pose_6d_e1, pose_6d_md, pose_6d_e2 = pose_all[:B], pose_all[B:2 * B], pose_all[2 * B:]

    mano_pose_e1 = rot6d_to_axis_angle(pose_6d_e1.reshape(-1, 6)).reshape(-1, ORIG_JOINT_NUM * 3)
    mano_pose_md = rot6d_to_axis_angle(pose_6d_md.reshape(-1, 6)).reshape(-1, ORIG_JOINT_NUM * 3)
    mano_pose_e2 = rot6d_to_axis_angle(pose_6d_e2.reshape(-1, 6)).reshape(-1, ORIG_JOINT_NUM * 3)

    cam_param_e1, cam_param_md, cam_param_e2 = jnp.split(cam_param, 3, axis=1)
    return (mano_shape_e1, mano_shape_md, mano_shape_e2,
            mano_pose_e1, mano_pose_md, mano_pose_e2,
            cam_param_e1, cam_param_md, cam_param_e2)


# Pure-JAX reference of the sequential PyTorch joint-regressor loop.
def _ref_joint_chain(feat_one, reg_ws, reg_bs):
    poses = []
    for k, anc in enumerate(ANCESTOR_INDEX):
        inp = jnp.concatenate([feat_one] + [poses[i] for i in anc], axis=1)
        poses.append(inp @ reg_ws[k] + reg_bs[k])
    return jnp.concatenate(poses, axis=1)


if __name__ == "__main__":
    key = jax.random.PRNGKey(0)
    k1, k2, k3, k4, k5, k6, k7 = jax.random.split(key, 7)
    feat_blur = jax.random.normal(k1, (BATCH, IN_CHANS, H, W), jnp.float32)
    feat_joint_e1 = jax.random.normal(k2, (BATCH, NUM_JOINTS, IN_CHANS_POSE), jnp.float32)
    feat_joint_md = jax.random.normal(k3, (BATCH, NUM_JOINTS, IN_CHANS_POSE), jnp.float32)
    feat_joint_e2 = jax.random.normal(k4, (BATCH, NUM_JOINTS, IN_CHANS_POSE), jnp.float32)
    joint_img_e1 = jax.random.normal(k5, (BATCH, NUM_JOINTS, 3), jnp.float32)
    joint_img_md = jax.random.normal(k6, (BATCH, NUM_JOINTS, 3), jnp.float32)
    joint_img_e2 = jax.random.normal(k7, (BATCH, NUM_JOINTS, 3), jnp.float32)

    params = init_params(jax.random.PRNGKey(1))

    outs = regressor_forward(params, feat_blur, feat_joint_e1, feat_joint_md, feat_joint_e2,
                             joint_img_e1, joint_img_md, joint_img_e2)
    outs = jax.block_until_ready(outs)

    # Correctness check of the fused Pallas kernel vs a pure-JAX reference.
    pooled = feat_blur.reshape(BATCH, IN_CHANS, -1).mean(axis=2)
    ref_shape = pooled @ params["w_shape"] + params["b_shape"]
    ref_cam = pooled @ params["w_cam"] + params["b_cam"]

    feat_one_e1 = jnp.concatenate([feat_joint_e1, joint_img_e1], axis=2).reshape(BATCH, -1)
    feat_one_md = jnp.concatenate([feat_joint_md, joint_img_md], axis=2).reshape(BATCH, -1)
    feat_one_e2 = jnp.concatenate([feat_joint_e2, joint_img_e2], axis=2).reshape(BATCH, -1)
    feat_all = jnp.concatenate([feat_one_e1, feat_one_md, feat_one_e2], axis=0)
    x_pool = jnp.transpose(feat_blur.reshape(BATCH, IN_CHANS, H * W), (0, 2, 1))

    got_heads, got_pose = regressor_fused(x_pool, params["w_heads"], params["b_heads"],
                                          feat_all, params["w_eff"], params["b_eff"])
    got_shape = got_heads[:, :SHAPE_OUT_DIM]
    got_cam = got_heads[:, SHAPE_OUT_DIM:HEADS_DIM]
    ref_pose = _ref_joint_chain(feat_all, params["reg_ws"], params["reg_bs"])

    assert jnp.allclose(got_shape, ref_shape, atol=1e-4, rtol=1e-4)
    assert jnp.allclose(got_cam, ref_cam, atol=1e-4, rtol=1e-4)
    assert jnp.allclose(got_pose[:, :POSE6D_DIM], ref_pose, atol=1e-3, rtol=1e-3)

    print("KERNEL_OK")
</pallas_src>

<mosaic_0001>
module attributes {stable_mosaic.version = 11 : i64} {
  func.func @_regressor_kernel(%arg0: i32, %arg1: memref<2x64x64xf32, #tpu.memory_space<vmem>>, %arg2: memref<64x128xf32, #tpu.memory_space<vmem>>, %arg3: memref<1x128xf32, #tpu.memory_space<vmem>>, %arg4: memref<6x140xf32, #tpu.memory_space<vmem>>, %arg5: memref<140x128xf32, #tpu.memory_space<vmem>>, %arg6: memref<1x128xf32, #tpu.memory_space<vmem>>, %arg7: memref<2x128xf32, #tpu.memory_space<vmem>>, %arg8: memref<6x128xf32, #tpu.memory_space<vmem>>) attributes {dimension_semantics = [#tpu.dimension_semantics<arbitrary>], iteration_bounds = array<i64: 1>, scalar_prefetch = 0 : i64, scratch_operands = 0 : i64, tpu.core_type = #tpu.core_type<tc>, window_params = [{pipeline_mode = #tpu.pipeline_mode<synchronous>, transform_indices = @transform_0, window_bounds = array<i64: 2, 64, 64>}, {pipeline_mode = #tpu.pipeline_mode<synchronous>, transform_indices = @transform_1, window_bounds = array<i64: 64, 128>}, {pipeline_mode = #tpu.pipeline_mode<synchronous>, transform_indices = @transform_2, window_bounds = array<i64: 1, 128>}, {pipeline_mode = #tpu.pipeline_mode<synchronous>, transform_indices = @transform_3, window_bounds = array<i64: 6, 140>}, {pipeline_mode = #tpu.pipeline_mode<synchronous>, transform_indices = @transform_4, window_bounds = array<i64: 140, 128>}, {pipeline_mode = #tpu.pipeline_mode<synchronous>, transform_indices = @transform_5, window_bounds = array<i64: 1, 128>}, {pipeline_mode = #tpu.pipeline_mode<synchronous>, transform_indices = @transform_6, window_bounds = array<i64: 2, 128>}, {pipeline_mode = #tpu.pipeline_mode<synchronous>, transform_indices = @transform_7, window_bounds = array<i64: 6, 128>}]} {
    %c0 = arith.constant 0 : index
    %c0_0 = arith.constant 0 : index
    %c0_1 = arith.constant 0 : index
    %0 = vector.load %arg1[%c0, %c0_0, %c0_1] : memref<2x64x64xf32, #tpu.memory_space<vmem>>, vector<2x64x64xf32>
    %cst = arith.constant dense<0.000000e+00> : vector<2x64xf32>
    %1 = vector.multi_reduction <add>, %0, %cst [1] : vector<2x64x64xf32> to vector<2x64xf32>
    %cst_2 = arith.constant 6.400000e+01 : f32
    %2 = vector.broadcast %cst_2 : f32 to vector<2x64xf32>
    %3 = arith.divf %1, %2 : vector<2x64xf32>
    %c0_3 = arith.constant 0 : index
    %c0_4 = arith.constant 0 : index
    %4 = vector.load %arg2[%c0_3, %c0_4] : memref<64x128xf32, #tpu.memory_space<vmem>>, vector<64x128xf32>
    %cst_5 = arith.constant dense<0.000000e+00> : vector<2x128xf32>
    %5 = tpu.matmul %3, %4, %cst_5 {dimension_numbers = #tpu.dot_dimension_numbers<[1], [0], [0], [1], [0, 0, 1, 1], [], []>} : vector<2x64xf32>, vector<64x128xf32>, vector<2x128xf32> -> vector<2x128xf32>
    %c0_6 = arith.constant 0 : index
    %c0_7 = arith.constant 0 : index
    %6 = vector.load %arg3[%c0_6, %c0_7] : memref<1x128xf32, #tpu.memory_space<vmem>>, vector<1x128xf32>
    %7 = vector.broadcast %6 : vector<1x128xf32> to vector<2x128xf32>
    %8 = arith.addf %5, %7 : vector<2x128xf32>
    %c0_8 = arith.constant 0 : index
    %c0_9 = arith.constant 0 : index
    %9 = vector.load %arg7[%c0_8, %c0_9] : memref<2x128xf32, #tpu.memory_space<vmem>>, vector<2x128xf32>
    tpu.vector_store %arg7[%c0_8, %c0_9], %8 {strides = array<i32>} : memref<2x128xf32, #tpu.memory_space<vmem>>, vector<2x128xf32>,
    %c0_10 = arith.constant 0 : index
    %c0_11 = arith.constant 0 : index
    %10 = vector.load %arg4[%c0_10, %c0_11] : memref<6x140xf32, #tpu.memory_space<vmem>>, vector<6x140xf32>
    %c0_12 = arith.constant 0 : index
    %c0_13 = arith.constant 0 : index
    %11 = vector.load %arg5[%c0_12, %c0_13] : memref<140x128xf32, #tpu.memory_space<vmem>>, vector<140x128xf32>
    %cst_14 = arith.constant dense<0.000000e+00> : vector<6x128xf32>
    %12 = tpu.matmul %10, %11, %cst_14 {dimension_numbers = #tpu.dot_dimension_numbers<[1], [0], [0], [1], [0, 0, 1, 1], [], []>} : vector<6x140xf32>, vector<140x128xf32>, vector<6x128xf32> -> vector<6x128xf32>
    %c0_15 = arith.constant 0 : index
    %c0_16 = arith.constant 0 : index
    %13 = vector.load %arg6[%c0_15, %c0_16] : memref<1x128xf32, #tpu.memory_space<vmem>>, vector<1x128xf32>
    %14 = vector.broadcast %13 : vector<1x128xf32> to vector<6x128xf32>
    %15 = arith.addf %12, %14 : vector<6x128xf32>
    %c0_17 = arith.constant 0 : index
    %c0_18 = arith.constant 0 : index
    %16 = vector.load %arg8[%c0_17, %c0_18] : memref<6x128xf32, #tpu.memory_space<vmem>>, vector<6x128xf32>
    tpu.vector_store %arg8[%c0_17, %c0_18], %15 {strides = array<i32>} : memref<6x128xf32, #tpu.memory_space<vmem>>, vector<6x128xf32>,
    return
  }
  func.func @transform_0(%arg0: i32) -> (i32, i32, i32) {
    %c0_i32 = arith.constant 0 : i32
    %c0_i32_0 = arith.constant 0 : i32
    %c0_i32_1 = arith.constant 0 : i32
    %c0_i32_2 = arith.constant 0 : i32
    return %c0_i32, %c0_i32_0, %c0_i32_1 : i32, i32, i32
  }
  func.func @transform_1(%arg0: i32) -> (i32, i32) {
    %c0_i32 = arith.constant 0 : i32
    %c0_i32_0 = arith.constant 0 : i32
    %c0_i32_1 = arith.constant 0 : i32
    return %c0_i32, %c0_i32_0 : i32, i32
  }
  func.func @transform_2(%arg0: i32) -> (i32, i32) {
    %c0_i32 = arith.constant 0 : i32
    %c0_i32_0 = arith.constant 0 : i32
    %c0_i32_1 = arith.constant 0 : i32
    return %c0_i32, %c0_i32_0 : i32, i32
  }
  func.func @transform_3(%arg0: i32) -> (i32, i32) {
    %c0_i32 = arith.constant 0 : i32
    %c0_i32_0 = arith.constant 0 : i32
    %c0_i32_1 = arith.constant 0 : i32
    return %c0_i32, %c0_i32_0 : i32, i32
  }
  func.func @transform_4(%arg0: i32) -> (i32, i32) {
    %c0_i32 = arith.constant 0 : i32
    %c0_i32_0 = arith.constant 0 : i32
    %c0_i32_1 = arith.constant 0 : i32
    return %c0_i32, %c0_i32_0 : i32, i32
  }
  func.func @transform_5(%arg0: i32) -> (i32, i32) {
    %c0_i32 = arith.constant 0 : i32
    %c0_i32_0 = arith.constant 0 : i32
    %c0_i32_1 = arith.constant 0 : i32
    return %c0_i32, %c0_i32_0 : i32, i32
  }
  func.func @transform_6(%arg0: i32) -> (i32, i32) {
    %c0_i32 = arith.constant 0 : i32
    %c0_i32_0 = arith.constant 0 : i32
    %c0_i32_1 = arith.constant 0 : i32
    return %c0_i32, %c0_i32_0 : i32, i32
  }
  func.func @transform_7(%arg0: i32) -> (i32, i32) {
    %c0_i32 = arith.constant 0 : i32
    %c0_i32_0 = arith.constant 0 : i32
    %c0_i32_1 = arith.constant 0 : i32
    return %c0_i32, %c0_i32_0 : i32, i32
  }
}

</mosaic_0001>

<llo_original>
// kernel: tpu_custom_call.1
$region0: #{tpu_custom_call.1}
  #allocation0 [shape = 'u32[]', space=smem, size = 0x4, offset = 0x4, fixed_abs, tag = 'smem constant byte address 0x4 - core index']
  #allocation1 [shape = 'u32[144,128]{1,0:T(1,128)}', space=vmem, size = 0x12000, scoped, tag = 'internal scratch']
  %s0 = inlined_call_operand.hbm [shape: f32[2,64,64], index: 0, kind: input, shape index: {}]
  %s1 = inlined_call_operand.hbm [shape: f32[64,128], index: 1, kind: input, shape index: {}]
  %s2 = inlined_call_operand.vmem [shape: f32[1,128], index: 2, kind: input, shape index: {}]
  %s3 = inlined_call_operand.hbm [shape: f32[6,140], index: 3, kind: input, shape index: {}]
  %s4 = inlined_call_operand.hbm [shape: f32[140,128], index: 4, kind: input, shape index: {}]
  %s5 = inlined_call_operand.vmem [shape: f32[1,128], index: 5, kind: input, shape index: {}]
  %s6 = inlined_call_operand.hbm [shape: f32[2,128], index: 6, kind: output, shape index: {0}]
  %s7 = inlined_call_operand.hbm [shape: f32[6,128], index: 7, kind: output, shape index: {1}]
  %8 = xla_tuple %s6, %s7
  %s9 = sld [smem:[#allocation0]]
  $region58: #{tpu_custom_call.1} parent=0
    _
  %s11 = ssub.s32 1, %s9
  %s12 = scalar_select 0, %s11, %s9
  $region1: #{tpu_custom_call.1} parent=0
    #allocation2 [shape = 'u8[65536]{0}', space=vmem, size = 0x10000, scoped, tag = 'input window, operand 0, single buffered']
    #allocation3 [shape = 's32[1]{0}', space=sflag, size = 0x4, scoped, tag = 'scoped memory for tpu_custom_call.1']
    #allocation4 [shape = 's32[1]{0}', space=sflag, size = 0x4, scoped, tag = 'scoped memory for tpu_custom_call.1']
    #allocation5 [shape = 'u8[32768]{0}', space=vmem, size = 0x8000, scoped, tag = 'input window, operand 1, single buffered']
    #allocation6 [shape = 's32[1]{0}', space=sflag, size = 0x4, scoped, tag = 'scoped memory for tpu_custom_call.1']
    #allocation7 [shape = 'u8[8192]{0}', space=vmem, size = 0x2000, scoped, tag = 'input window, operand 3, single buffered']
    #allocation8 [shape = 'u8[73728]{0}', space=vmem, size = 0x12000, scoped, tag = 'input window, operand 4, single buffered']
    #allocation9 [shape = 's32[1]{0}', space=sflag, size = 0x4, scoped, tag = 'scoped memory for tpu_custom_call.1']
    #allocation10 [shape = 'u8[1024]{0}', space=vmem, size = 0x400, scoped, tag = 'output window, operand 0, single buffered']
    #allocation11 [shape = 'u8[4096]{0}', space=vmem, size = 0x1000, scoped, tag = 'output window, operand 1, single buffered']
    #allocation12 [shape = 's32[1]{0}', space=sflag, size = 0x4, scoped, tag = 'scoped memory for tpu_custom_call.1']
    %13 = vsyncpa [#allocation3], 0
    %14 = vsyncpa [#allocation6], 0
    %15 = vsyncpa [#allocation9], 0
    %16 = vsyncpa [#allocation4], 0
    %17 = vsyncpa [#allocation12], 0
    // Predicated region
    $region2: #{tpu_custom_call.1} parent=1 // pred_check
      _
    $region3: #{tpu_custom_call.1} parent=1 // pred_check_branch
      %19 = sbr.rel (0) target = $region5
    $region4: #{tpu_custom_call.1} parent=1 // pred_region
      %s21 = ssub.s32 2048, 2048
      %22 = vsyncadd [#allocation3], %s21
      %s23 = sshll.u32 [#allocation2], 4
      %s24 = int_to_ptr.vmem [resolvable:$true] %s23
      %29 = dma.hbm_to_vmem [thread:$0]  %s0, 2048, %s24, [#allocation3], 128, 128, 8
    $region5: #{tpu_custom_call.1} parent=1 // pred_fallthru
      _
    // Predicated region
    $region6: #{tpu_custom_call.1} parent=1 // pred_check
      _
    $region7: #{tpu_custom_call.1} parent=1 // pred_check_branch
      %31 = sbr.rel (0) target = $region9
    $region8: #{tpu_custom_call.1} parent=1 // pred_region
      %s33 = ssub.s32 1024, 1024
      %34 = vsyncadd [#allocation6], %s33
      %s35 = sshll.u32 [#allocation5], 4
      %s36 = int_to_ptr.vmem [resolvable:$true] %s35
      %41 = dma.hbm_to_vmem [thread:$0]  %s1, 1024, %s36, [#allocation6], 128, 128, 8
    $region9: #{tpu_custom_call.1} parent=1 // pred_fallthru
      _
    // Predicated region
    $region10: #{tpu_custom_call.1} parent=1 // pred_check
      _
    $region11: #{tpu_custom_call.1} parent=1 // pred_check_branch
      %43 = sbr.rel (0) target = $region13
    $region12: #{tpu_custom_call.1} parent=1 // pred_region
      _
    $region13: #{tpu_custom_call.1} parent=1 // pred_fallthru
      _
    // Predicated region
    $region14: #{tpu_custom_call.1} parent=1 // pred_check
      _
    $region15: #{tpu_custom_call.1} parent=1 // pred_check_branch
      %45 = sbr.rel (0) target = $region17
    $region16: #{tpu_custom_call.1} parent=1 // pred_region
      %s47 = ssub.s32 256, 256
      %48 = vsyncadd [#allocation6], %s47
      %s50 = sshll.u32 [#allocation7], 4
      %s51 = int_to_ptr.vmem [resolvable:$true] %s50
      %53 = dma.hbm_to_vmem [thread:$0]  %s3, 256, %s51, [#allocation6]
    $region17: #{tpu_custom_call.1} parent=1 // pred_fallthru
      _
    // Predicated region
    $region18: #{tpu_custom_call.1} parent=1 // pred_check
      _
    $region19: #{tpu_custom_call.1} parent=1 // pred_check_branch
      %55 = sbr.rel (0) target = $region21
    $region20: #{tpu_custom_call.1} parent=1 // pred_region
      %s57 = ssub.s32 2304, 2304
      %58 = vsyncadd [#allocation9], %s57
      %s59 = sshll.u32 [#allocation8], 4
      %s60 = int_to_ptr.vmem [resolvable:$true] %s59
      %65 = dma.hbm_to_vmem [thread:$0]  %s4, 2304, %s60, [#allocation9], 128, 128, 8
    $region21: #{tpu_custom_call.1} parent=1 // pred_fallthru
      _
    // Predicated region
    $region22: #{tpu_custom_call.1} parent=1 // pred_check
      _
    $region23: #{tpu_custom_call.1} parent=1 // pred_check_branch
      %67 = sbr.rel (0) target = $region25
    $region24: #{tpu_custom_call.1} parent=1 // pred_region
      _
    $region25: #{tpu_custom_call.1} parent=1 // pred_fallthru
      _
    // Predicated region
    $region26: #{tpu_custom_call.1} parent=1 // pred_check
      _
    $region27: #{tpu_custom_call.1} parent=1 // pred_check_branch
      %69 = sbr.rel (0) target = $region29
    $region28: #{tpu_custom_call.1} parent=1 // pred_region
      %70 = dma.done [#allocation3], 2048
    $region29: #{tpu_custom_call.1} parent=1 // pred_fallthru
      _
    // Predicated region
    $region30: #{tpu_custom_call.1} parent=1 // pred_check
      _
    $region31: #{tpu_custom_call.1} parent=1 // pred_check_branch
      %72 = sbr.rel (0) target = $region33
    $region32: #{tpu_custom_call.1} parent=1 // pred_region
      %73 = dma.done [#allocation6], 1024
    $region33: #{tpu_custom_call.1} parent=1 // pred_fallthru
      _
    // Predicated region
    $region34: #{tpu_custom_call.1} parent=1 // pred_check
      _
    $region35: #{tpu_custom_call.1} parent=1 // pred_check_branch
      %75 = sbr.rel (0) target = $region37
    $region36: #{tpu_custom_call.1} parent=1 // pred_region
      %76 = dma.done [#allocation6], 256
    $region37: #{tpu_custom_call.1} parent=1 // pred_fallthru
      _
    // Predicated region
    $region38: #{tpu_custom_call.1} parent=1 // pred_check
      _
    $region39: #{tpu_custom_call.1} parent=1 // pred_check_branch
      %78 = sbr.rel (0) target = $region41
    $region40: #{tpu_custom_call.1} parent=1 // pred_region
      %79 = dma.done [#allocation9], 2304
    $region41: #{tpu_custom_call.1} parent=1 // pred_fallthru
      _
    %v80 = vld [vmem:[#allocation2] sm:$0xff]
    %v81 = vld [vmem:[#allocation2 + $0x8] sm:$0xff]
    %v82 = vld [vmem:[#allocation2 + $0x10] sm:$0xff]
    %v83 = vld [vmem:[#allocation2 + $0x18] sm:$0xff]
    %v84 = vld [vmem:[#allocation2 + $0x20] sm:$0xff]
    %v85 = vld [vmem:[#allocation2 + $0x28] sm:$0xff]
    %v86 = vld [vmem:[#allocation2 + $0x30] sm:$0xff]
    %v87 = vld [vmem:[#allocation2 + $0x38] sm:$0xff]
    %v88 = vld [vmem:[#allocation2 + $0x40] sm:$0xff]
    %v89 = vld [vmem:[#allocation2 + $0x48] sm:$0xff]
    %v90 = vld [vmem:[#allocation2 + $0x50] sm:$0xff]
    %v91 = vld [vmem:[#allocation2 + $0x58] sm:$0xff]
    %v92 = vld [vmem:[#allocation2 + $0x60] sm:$0xff]
    %v93 = vld [vmem:[#allocation2 + $0x68] sm:$0xff]
    %v94 = vld [vmem:[#allocation2 + $0x70] sm:$0xff]
    %v95 = vld [vmem:[#allocation2 + $0x78] sm:$0xff]
    %vm96 = vcmask 523264
    %v97 = vsel %vm96, %v80, 0.0
    %v98 = vsel %vm96, %v81, 0.0
    %v99 = vadd.f32 %v97, %v98
    %v100 = vsel %vm96, %v82, 0.0
    %v101 = vadd.f32 %v99, %v100
    %v102 = vsel %vm96, %v83, 0.0
    %v103 = vadd.f32 %v101, %v102
    %v104 = vsel %vm96, %v84, 0.0
    %v105 = vadd.f32 %v103, %v104
    %v106 = vsel %vm96, %v85, 0.0
    %v107 = vadd.f32 %v105, %v106
    %v108 = vsel %vm96, %v86, 0.0
    %v109 = vadd.f32 %v107, %v108
    %v110 = vsel %vm96, %v87, 0.0
    %v111 = vadd.f32 %v109, %v110
    %v112 = vrot.slane %v111, 4
    %v113 = vadd.f32 %v111, %v112
    %v114 = vrot.slane %v113, 2
    %v115 = vadd.f32 %v113, %v114
    %v116 = vrot.slane %v115, 1
    %v117 = vadd.f32 %v115, %v116
    %v118 = vsel %vm96, %v88, 0.0
    %v119 = vsel %vm96, %v89, 0.0
    %v120 = vadd.f32 %v118, %v119
    %v121 = vsel %vm96, %v90, 0.0
    %v122 = vadd.f32 %v120, %v121
    %v123 = vsel %vm96, %v91, 0.0
    %v124 = vadd.f32 %v122, %v123
    %v125 = vsel %vm96, %v92, 0.0
    %v126 = vadd.f32 %v124, %v125
    %v127 = vsel %vm96, %v93, 0.0
    %v128 = vadd.f32 %v126, %v127
    %v129 = vsel %vm96, %v94, 0.0
    %v130 = vadd.f32 %v128, %v129
    %v131 = vsel %vm96, %v95, 0.0
    %v132 = vadd.f32 %v130, %v131
    %v133 = vrot.slane %v132, 4
    %v134 = vadd.f32 %v132, %v133
    %v135 = vrot.slane %v134, 2
    %v136 = vadd.f32 %v134, %v135
    %v137 = vrot.slane %v136, 1
    %v138 = vadd.f32 %v136, %v137
    %v139 = vrcp.pop 64.0
    %v140 = vmul.f32 %v117, %v139
    %v141 = vmul.f32 %v138, %v139
    %v142 = vld [vmem:[#allocation5] sm:$0xff]
    %v143 = vld [vmem:[#allocation5 + $0x8] sm:$0xff]
    %v144 = vld [vmem:[#allocation5 + $0x10] sm:$0xff]
    %v145 = vld [vmem:[#allocation5 + $0x18] sm:$0xff]
    %v146 = vld [vmem:[#allocation5 + $0x20] sm:$0xff]
    %v147 = vld [vmem:[#allocation5 + $0x28] sm:$0xff]
    %v148 = vld [vmem:[#allocation5 + $0x30] sm:$0xff]
    %v149 = vld [vmem:[#allocation5 + $0x38] sm:$0xff]
    %v150 = vld [vmem:[%s2] sm:$0x1]
    %v152 = vlaneseq
    %v153 = vshrl.u32 %v152, 7
    %v154 = vsub.s32 0, %v153
    %v155 = vrot.slane %v150, %v154
    %vm159 = vcmask 1041409
    %v160 = vsel %vm159, %v141, %v140
    %v161 = vsel %vm96, %v160, 0
    %163 = vmatprep.subr.mxu0 0.0
    %164 = vmatpush1.msra.mxu0 0.0
    %165 = vmatprep.subr.mxu0 0.0
    %166 = vmatpush1.msra.mxu0 0.0
    %167 = vmatprep.subr.mxu0 0.0
    %168 = vmatpush1.msra.mxu0 0.0
    %169 = vmatprep.subr.mxu0 0.0
    %170 = vmatpush1.msra.mxu0 0.0
    %171 = vmatprep.subr.mxu0 0.0
    %172 = vmatpush1.msra.mxu0 0.0
    %173 = vmatprep.subr.mxu0 0.0
    %174 = vmatpush1.msra.mxu0 0.0
    %175 = vmatprep.subr.mxu0 0.0
    %176 = vmatpush1.msra.mxu0 0.0
    %177 = vmatprep.subr.mxu0 0.0
    %178 = vmatpush1.msra.mxu0 0.0
    %179 = vmatprep.subr.mxu0 0.0
    %180 = vmatpush1.msra.mxu0 %v149
    %181 = vmatprep.subr.mxu0 0.0
    %182 = vmatpush1.msra.mxu0 %v148
    %183 = vmatprep.subr.mxu0 0.0
    %184 = vmatpush1.msra.mxu0 %v147
    %185 = vmatprep.subr.mxu0 0.0
    %186 = vmatpush1.msra.mxu0 %v146
    %187 = vmatprep.subr.mxu0 0.0
    %188 = vmatpush1.msra.mxu0 %v145
    %189 = vmatprep.subr.mxu0 0.0
    %190 = vmatpush1.msra.mxu0 %v144
    %191 = vmatprep.subr.mxu0 0.0
    %192 = vmatpush1.msra.mxu0 %v143
    %193 = vmatprep.subr.mxu0 0.0
    %194 = vmatpush1.msra.mxu0 %v142
    %195 = vmatprep.subr.mxu0 0.0
    %196 = vmatpush2.msra.mxu0 0.0
    %197 = vmatprep.subr.mxu0 0.0
    %198 = vmatpush2.msra.mxu0 0.0
    %199 = vmatprep.subr.mxu0 0.0
    %200 = vmatpush2.msra.mxu0 0.0
    %201 = vmatprep.subr.mxu0 0.0
    %202 = vmatpush2.msra.mxu0 0.0
    %203 = vmatprep.subr.mxu0 0.0
    %204 = vmatpush2.msra.mxu0 0.0
    %205 = vmatprep.subr.mxu0 0.0
    %206 = vmatpush2.msra.mxu0 0.0
    %207 = vmatprep.subr.mxu0 0.0
    %208 = vmatpush2.msra.mxu0 0.0
    %209 = vmatprep.subr.mxu0 0.0
    %210 = vmatpush2.msra.mxu0 0.0
    %211 = vmatprep.subr.mxu0 0.0
    %212 = vmatpush2.msra.mxu0 0.0
    %213 = vmatprep.subr.mxu0 0.0
    %214 = vmatpush2.msra.mxu0 0.0
    %215 = vmatprep.subr.mxu0 0.0
    %216 = vmatpush2.msra.mxu0 0.0
    %217 = vmatprep.subr.mxu0 0.0
    %218 = vmatpush2.msra.mxu0 0.0
    %219 = vmatprep.subr.mxu0 0.0
    %220 = vmatpush2.msra.mxu0 0.0
    %221 = vmatprep.subr.mxu0 0.0
    %222 = vmatpush2.msra.mxu0 0.0
    %223 = vmatprep.subr.mxu0 0.0
    %224 = vmatpush2.msra.mxu0 0.0
    %225 = vmatprep.subr.mxu0 0.0
    %226 = vmatpush2.msra.mxu0 0.0
    %227 = vmatprep.mubr.f32.mxu0 0.0
    %228 = vmatmul.mubr.f32.gmra.mxu0 %v161
    %v229 = vpop.f32.mrf.mxu0
    %v230 = vadd.f32 %v155, %v229
    %v231 = vpop.f32.mrf.mxu0
    %232 = vdwg.mxu0
    %233 = vst [vmem:[#allocation10] sm:$0x3] %v230
    %v234 = vld [vmem:[#allocation7] sm:$0x3f]
    %v235 = vld [vmem:[#allocation7 + $0x8] sm:$0x3f]
    %v236 = vld [vmem:[#allocation8] sm:$0xff]
    %v237 = vld [vmem:[#allocation8 + $0x8] sm:$0xff]
    %v238 = vld [vmem:[#allocation8 + $0x10] sm:$0xff]
    %v239 = vld [vmem:[#allocation8 + $0x18] sm:$0xff]
    %v240 = vld [vmem:[#allocation8 + $0x20] sm:$0xff]
    %v241 = vld [vmem:[#allocation8 + $0x28] sm:$0xff]
    %v242 = vld [vmem:[#allocation8 + $0x30] sm:$0xff]
    %v243 = vld [vmem:[#allocation8 + $0x38] sm:$0xff]
    %v244 = vld [vmem:[#allocation8 + $0x40] sm:$0xff]
    %v245 = vld [vmem:[#allocation8 + $0x48] sm:$0xff]
    %v246 = vld [vmem:[#allocation8 + $0x50] sm:$0xff]
    %v247 = vld [vmem:[#allocation8 + $0x58] sm:$0xff]
    %v248 = vld [vmem:[#allocation8 + $0x60] sm:$0xff]
    %v249 = vld [vmem:[#allocation8 + $0x68] sm:$0xff]
    %v250 = vld [vmem:[#allocation8 + $0x70] sm:$0xff]
    %v251 = vld [vmem:[#allocation8 + $0x78] sm:$0xff]
    %v252 = vld [vmem:[#allocation8 + $0x80] sm:$0xff]
    %v253 = vld [vmem:[#allocation8 + $0x88] sm:$0xf]
    %v254 = vld [vmem:[%s5] sm:$0x1]
    %v256 = vlaneseq
    %v257 = vshrl.u32 %v256, 7
    %v258 = vsub.s32 0, %v257
    %v259 = vrot.slane %v254, %v258
    %vm261 = vcmask 97280
    %v263 = vsel %vm261, %v235, 0
    %vm265 = vcmask 1043456
    %v267 = vsel %vm265, %v253, 0
    %269 = vmatprep.subr.mxu0 0.0
    %270 = vmatpush1.msra.mxu0 %v251
    %271 = vmatprep.subr.mxu0 0.0
    %272 = vmatpush1.msra.mxu0 %v250
    %273 = vmatprep.subr.mxu0 0.0
    %274 = vmatpush1.msra.mxu0 %v249
    %275 = vmatprep.subr.mxu0 0.0
    %276 = vmatpush1.msra.mxu0 %v248
    %277 = vmatprep.subr.mxu0 0.0
    %278 = vmatpush1.msra.mxu0 %v247
    %279 = vmatprep.subr.mxu0 0.0
    %280 = vmatpush1.msra.mxu0 %v246
    %281 = vmatprep.subr.mxu0 0.0
    %282 = vmatpush1.msra.mxu0 %v245
    %283 = vmatprep.subr.mxu0 0.0
    %284 = vmatpush1.msra.mxu0 %v244
    %285 = vmatprep.subr.mxu0 0.0
    %286 = vmatpush1.msra.mxu0 %v243
    %287 = vmatprep.subr.mxu0 0.0
    %288 = vmatpush1.msra.mxu0 %v242
    %289 = vmatprep.subr.mxu0 0.0
    %290 = vmatpush1.msra.mxu0 %v241
    %291 = vmatprep.subr.mxu0 0.0
    %292 = vmatpush1.msra.mxu0 %v240
    %293 = vmatprep.subr.mxu0 0.0
    %294 = vmatpush1.msra.mxu0 %v239
    %295 = vmatprep.subr.mxu0 0.0
    %296 = vmatpush1.msra.mxu0 %v238
    %297 = vmatprep.subr.mxu0 0.0
    %298 = vmatpush1.msra.mxu0 %v237
    %299 = vmatprep.subr.mxu0 0.0
    %300 = vmatpush1.msra.mxu0 %v236
    %301 = vmatprep.subr.mxu0 0.0
    %302 = vmatpush2.msra.mxu0 0.0
    %303 = vmatprep.subr.mxu0 0.0
    %304 = vmatpush2.msra.mxu0 0.0
    %305 = vmatprep.subr.mxu0 0.0
    %306 = vmatpush2.msra.mxu0 0.0
    %307 = vmatprep.subr.mxu0 0.0
    %308 = vmatpush2.msra.mxu0 0.0
    %309 = vmatprep.subr.mxu0 0.0
    %310 = vmatpush2.msra.mxu0 0.0
    %311 = vmatprep.subr.mxu0 0.0
    %312 = vmatpush2.msra.mxu0 0.0
    %313 = vmatprep.subr.mxu0 0.0
    %314 = vmatpush2.msra.mxu0 0.0
    %315 = vmatprep.subr.mxu0 0.0
    %316 = vmatpush2.msra.mxu0 0.0
    %317 = vmatprep.subr.mxu0 0.0
    %318 = vmatpush2.msra.mxu0 0.0
    %319 = vmatprep.subr.mxu0 0.0
    %320 = vmatpush2.msra.mxu0 0.0
    %321 = vmatprep.subr.mxu0 0.0
    %322 = vmatpush2.msra.mxu0 0.0
    %323 = vmatprep.subr.mxu0 0.0
    %324 = vmatpush2.msra.mxu0 0.0
    %325 = vmatprep.subr.mxu0 0.0
    %326 = vmatpush2.msra.mxu0 0.0
    %327 = vmatprep.subr.mxu0 0.0
    %328 = vmatpush2.msra.mxu0 0.0
    %329 = vmatprep.subr.mxu0 0.0
    %330 = vmatpush2.msra.mxu0 %v267
    %331 = vmatprep.subr.mxu0 0.0
    %332 = vmatpush2.msra.mxu0 %v252
    %333 = vmatprep.mubr.f32.mxu0 %v263
    %334 = vmatmul.mubr.f32.gmra.mxu0 %v234
    %v335 = vpop.f32.mrf.mxu0
    %v336 = vadd.f32 %v259, %v335
    %v337 = vpop.f32.mrf.mxu0
    %338 = vdwg.mxu0
    %339 = vst [vmem:[#allocation11] sm:$0x3f] %v336
    // Predicated region
    $region42: #{tpu_custom_call.1} parent=1 // pred_check
      _
    $region43: #{tpu_custom_call.1} parent=1 // pred_check_branch
      %341 = sbr.rel (0) target = $region45
    $region44: #{tpu_custom_call.1} parent=1 // pred_region
      %s343 = ssub.s32 32, 32
      %344 = vsyncadd [#allocation4], %s343
      %s346 = sshll.u32 [#allocation10], 4
      %s347 = int_to_ptr.vmem [resolvable:$true] %s346
      %349 = dma.vmem_to_hbm [thread:$0]  %s347, 32, %s6, [#allocation4]
    $region45: #{tpu_custom_call.1} parent=1 // pred_fallthru
      _
    // Predicated region
    $region46: #{tpu_custom_call.1} parent=1 // pred_check
      _
    $region47: #{tpu_custom_call.1} parent=1 // pred_check_branch
      %351 = sbr.rel (0) target = $region49
    $region48: #{tpu_custom_call.1} parent=1 // pred_region
      %s353 = ssub.s32 128, 128
      %354 = vsyncadd [#allocation12], %s353
      %s356 = sshll.u32 [#allocation11], 4
      %s357 = int_to_ptr.vmem [resolvable:$true] %s356
      %359 = dma.vmem_to_hbm [thread:$0]  %s357, 128, %s7, [#allocation12]
    $region49: #{tpu_custom_call.1} parent=1 // pred_fallthru
      _
    // Predicated region
    $region50: #{tpu_custom_call.1} parent=1 // pred_check
      _
    $region51: #{tpu_custom_call.1} parent=1 // pred_check_branch
      %361 = sbr.rel (0) target = $region53
    $region52: #{tpu_custom_call.1} parent=1 // pred_region
      %362 = dma.done [#allocation4], 32
    $region53: #{tpu_custom_call.1} parent=1 // pred_fallthru
      _
    // Predicated region
    $region54: #{tpu_custom_call.1} parent=1 // pred_check
      _
    $region55: #{tpu_custom_call.1} parent=1 // pred_check_branch
      %364 = sbr.rel (0) target = $region57
    $region56: #{tpu_custom_call.1} parent=1 // pred_region
      %365 = dma.done [#allocation12], 128
    $region57: #{tpu_custom_call.1} parent=1 // pred_fallthru
      _
    %366 = vsyncpa [#allocation3], 1
    %367 = vsyncpa [#allocation6], 1
    %368 = vsyncpa [#allocation9], 1
    %369 = vsyncpa [#allocation4], 1
    %370 = vsyncpa [#allocation12], 1

</llo_original>
